<compile_context>
chip_gen: v7x
topology: tpu7x:2x2x1
jax: 0.10.0
libtpu: 0.0.40
codegen_flags: <defaults>
</compile_context>

<pallas_src>
import math
from functools import partial

import jax
import jax.numpy as jnp
from jax.experimental import pallas as pl
from jax.experimental.pallas import tpu as pltpu


def _round_up(x, m):
    return ((x + m - 1) // m) * m


# --------------------------------------------------------------------------- #
# Kernel
# --------------------------------------------------------------------------- #
def _gauss_policy_kernel(n_hidden, split, sigma_lo, sigma_hi, *refs):
    """refs = [obs_tile, W0, b0, W_1..W_{n_hidden-1}, W_head, out].

    Layer 0: plain dot(obs, W0) + b0 (b0 also writes the 1.0 "ones column" so
    the bias fold propagates).  Layers 1..n-1 and the head use bias-folded,
    lane-padded weights -> just dot (+ ReLU).  The head produces one fused
    slab: lanes [0, split) are mu, lanes [split, 2*split) are pre-softplus std
    logits; softplus (+ optional clip) is applied to the whole slab and a
    lane-index `where` keeps mu lanes untouched.
    """
    obs_ref = refs[0]
    w0_ref = refs[1]
    b0_ref = refs[2]
    w_refs = refs[3:3 + (n_hidden - 1)]
    w_head_ref = refs[3 + (n_hidden - 1)]
    out_ref = refs[4 + (n_hidden - 1)]

    h = jnp.maximum(
        jnp.dot(obs_ref[...], w0_ref[...], preferred_element_type=jnp.float32)
        + b0_ref[...],
        0.0,
    )
    for i in range(n_hidden - 1):
        h = jnp.maximum(
            jnp.dot(h, w_refs[i][...], preferred_element_type=jnp.float32), 0.0)

    z = jnp.dot(h, w_head_ref[...], preferred_element_type=jnp.float32)

    # Softplus on the full slab (EUP/VPU have slack; narrowing would add
    # lane-repack work for zero wall-clock gain).
    sigma = jnp.logaddexp(z, 0.0)
    if sigma_lo is not None and sigma_hi is not None:
        sigma = jnp.clip(sigma, sigma_lo, sigma_hi)

    lane = jax.lax.broadcasted_iota(jnp.int32, z.shape, 1)
    out_ref[...] = jnp.where(lane >= split, sigma, z).astype(out_ref.dtype)


# --------------------------------------------------------------------------- #
# Parameter packing (static prep, do once)
# --------------------------------------------------------------------------- #
def pack_gauss_policy_params(params, obs_dim):
    """Fold biases into weights (layers >= 1) and lane-pad to multiples of 128.

    Layer 0 keeps its natural input width (obs_dim) and a separate padded bias
    row; the bias row carries a 1.0 at column hidden0_dim (the "ones column"),
    which ReLU preserves, so every later layer can fold its bias into that row
    of its padded weight.  The mu / std heads are fused into a single
    [hidden_p, 2*split] matrix (mu lanes [0, out_dim), std lanes
    [split, split+out_dim)).
    """
    hidden = params["hidden"]
    assert len(hidden) >= 1, "AmortisedGaussNet requires at least one hidden layer"
    w_mu, b_mu = params["mu"]
    w_std, b_std = params["std"]
    out_dim = int(w_mu.shape[1])
    split = _round_up(out_dim, 64)       # sigma lanes start here
    head_p = 2 * split                   # multiple of 128

    # --- layer 0: natural-width weight + padded bias (with ones column) ---
    w0, b0 = hidden[0]
    h0_dim = int(w0.shape[1])
    h0_p = _round_up(h0_dim + 1, 128)    # +1 reserves the ones column
    w0_p = jnp.zeros((obs_dim, h0_p), jnp.float32)
    w0_p = w0_p.at[:, :h0_dim].set(w0.astype(jnp.float32))
    b0_p = jnp.zeros((1, h0_p), jnp.float32)
    b0_p = b0_p.at[0, :h0_dim].set(b0.astype(jnp.float32))
    b0_p = b0_p.at[0, h0_dim].set(1.0)                        # ones column

    # --- layers 1..n-1: bias-folded, lane-padded ---
    packed_ws = []
    in_dim, in_p, ones_col = h0_dim, h0_p, h0_dim
    for (w, b) in hidden[1:]:
        h_dim = int(w.shape[1])
        h_p = _round_up(h_dim + 1, 128)
        wp = jnp.zeros((in_p, h_p), jnp.float32)
        wp = wp.at[:in_dim, :h_dim].set(w.astype(jnp.float32))
        wp = wp.at[ones_col, :h_dim].set(b.astype(jnp.float32))   # bias row
        wp = wp.at[ones_col, h_dim].set(1.0)                      # propagate ones
        packed_ws.append(wp)
        in_dim, in_p, ones_col = h_dim, h_p, h_dim

    # --- fused mu|std head ---
    wh = jnp.zeros((in_p, head_p), jnp.float32)
    wh = wh.at[:in_dim, :out_dim].set(w_mu.astype(jnp.float32))
    wh = wh.at[ones_col, :out_dim].set(b_mu.astype(jnp.float32))
    wh = wh.at[:in_dim, split:split + out_dim].set(w_std.astype(jnp.float32))
    wh = wh.at[ones_col, split:split + out_dim].set(b_std.astype(jnp.float32))

    return {
        "w0": w0_p,
        "b0": b0_p,
        "hidden_w": packed_ws,
        "head_w": wh,
        "obs_dim": obs_dim,
        "out_dim": out_dim,
        "split": split,
        "head_p": head_p,
    }


# --------------------------------------------------------------------------- #
# Forward wrapper
# --------------------------------------------------------------------------- #
def gauss_policy_forward(obs, packed, log_sigma_min=None, log_sigma_max=None,
                         block_b=2048):
    """Runs the Pallas kernel; returns (mu, sigma) with shape [B, out_dim]."""
    B = int(obs.shape[0])
    obs_dim = packed["obs_dim"]
    out_dim = packed["out_dim"]
    split = packed["split"]
    head_p = packed["head_p"]
    w0, b0 = packed["w0"], packed["b0"]
    ws = packed["hidden_w"]
    wh = packed["head_w"]
    n_hidden = 1 + len(ws)

    # Batch tile: big enough to amortize the ~0.35 us per-grid-step overhead,
    # but capped so the grid has >= 2 balanced steps whenever possible (lets
    # "parallel" shard the batch across v7x's two TensorCores).
    if B >= 16:
        tb = min(block_b, _round_up(pl.cdiv(B, 2), 8))
    else:
        tb = _round_up(max(B, 1), 8)
    b_pad = _round_up(B, tb)

    # Only the batch axis is padded (rows are obs_dim*4 bytes, cheap); the
    # lane axis stays at its natural width -- no 8x-inflated obs read.
    obs_f = obs.astype(jnp.float32)
    if b_pad != B:
        obs_f = jnp.pad(obs_f, ((0, b_pad - B), (0, 0)))

    sigma_lo = None if log_sigma_min is None else math.exp(log_sigma_min)
    sigma_hi = None if log_sigma_max is None else math.exp(log_sigma_max)

    kernel = partial(_gauss_policy_kernel, n_hidden, split, sigma_lo, sigma_hi)

    grid = (b_pad // tb,)
    obs_spec = pl.BlockSpec((tb, obs_dim), lambda i: (i, 0))

    def resident(arr):
        # Same block index every grid step -> weights fetched once, stay in VMEM.
        return pl.BlockSpec(tuple(int(d) for d in arr.shape), lambda i: (0, 0))

    in_specs = ([obs_spec, resident(w0), resident(b0)]
                + [resident(w) for w in ws] + [resident(wh)])
    out_spec = pl.BlockSpec((tb, head_p), lambda i: (i, 0))

    all_w = [w0] + ws + [wh]
    flops = 2 * b_pad * sum(int(w.shape[0]) * int(w.shape[1]) for w in all_w)
    bytes_accessed = (b_pad * obs_dim * 4                        # obs read
                      + sum(int(w.size) * 4 for w in all_w)      # weights
                      + int(b0.size) * 4                         # layer-0 bias
                      + b_pad * head_p * 4)                      # fused output
    transcendentals = 2 * b_pad * head_p        # exp + log1p per slab lane

    out = pl.pallas_call(
        kernel,
        out_shape=jax.ShapeDtypeStruct((b_pad, head_p), jnp.float32),
        grid=grid,
        in_specs=in_specs,
        out_specs=out_spec,
        compiler_params=pltpu.CompilerParams(
            dimension_semantics=("parallel",),   # shard batch across TCs (v7x)
            vmem_limit_bytes=32 * 1024 * 1024,
        ),
        cost_estimate=pl.CostEstimate(
            flops=flops,
            transcendentals=transcendentals,
            bytes_accessed=bytes_accessed,
        ),
    )(obs_f, w0, b0, *ws, wh)

    # Slice both logical views out of the single lane-dense slab.
    mu = out[:B, :out_dim]
    sigma = out[:B, split:split + out_dim]
    return mu, sigma


# --------------------------------------------------------------------------- #
# Init + pure-JAX reference
# --------------------------------------------------------------------------- #
def _init_linear(key, fan_in, fan_out):
    """PyTorch nn.Linear default init: U(-1/sqrt(fan_in), 1/sqrt(fan_in))."""
    kw, kb = jax.random.split(key)
    bound = 1.0 / math.sqrt(fan_in)
    w = jax.random.uniform(kw, (fan_in, fan_out), jnp.float32, -bound, bound)
    b = jax.random.uniform(kb, (fan_out,), jnp.float32, -bound, bound)
    return w, b


def init_gauss_policy_params(key, obs_dim, action_dim, hiddens,
                             two_action_vectors=False):
    out_dim = 2 * action_dim if two_action_vectors else action_dim
    keys = jax.random.split(key, len(hiddens) + 2)
    hidden = []
    in_dim = obs_dim
    for i, h in enumerate(hiddens):
        hidden.append(_init_linear(keys[i], in_dim, h))
        in_dim = h
    mu = _init_linear(keys[len(hiddens)], in_dim, out_dim)
    std = _init_linear(keys[len(hiddens) + 1], in_dim, out_dim)
    return {"hidden": hidden, "mu": mu, "std": std}


def _reference_forward(obs, params, log_sigma_min=None, log_sigma_max=None):
    h = obs
    for w, b in params["hidden"]:
        h = jnp.maximum(h @ w + b, 0.0)
    w_mu, b_mu = params["mu"]
    w_std, b_std = params["std"]
    mu = h @ w_mu + b_mu
    sigma = jax.nn.softplus(h @ w_std + b_std)
    if log_sigma_min is not None and log_sigma_max is not None:
        sigma = jnp.clip(sigma, math.exp(log_sigma_min), math.exp(log_sigma_max))
    return mu, sigma


# --------------------------------------------------------------------------- #
if __name__ == "__main__":
    # Small shapes consistent with the module's forward.
    batch, obs_dim, action_dim = 8, 16, 8
    hiddens = [32, 32]

    key = jax.random.PRNGKey(0)
    k_obs, k_params, k_obs2 = jax.random.split(key, 3)

    obs = jax.random.normal(k_obs, (batch, obs_dim), dtype=jnp.float32)
    params = init_gauss_policy_params(k_params, obs_dim, action_dim, hiddens)
    packed = pack_gauss_policy_params(params, obs_dim)

    # --- unclamped sigma path ---
    mu, sigma = gauss_policy_forward(obs, packed)
    mu, sigma = jax.block_until_ready((mu, sigma))
    ref_mu, ref_sigma = _reference_forward(obs, params)

    assert mu.shape == (batch, action_dim) and sigma.shape == (batch, action_dim)
    assert jnp.allclose(mu, ref_mu, atol=1e-4, rtol=1e-4)
    assert jnp.allclose(sigma, ref_sigma, atol=1e-4, rtol=1e-4)
    assert bool(jnp.all(sigma > 0.0))

    # --- clamped sigma path (log_sigma_min/max set) ---
    lo, hi = -4.0, 1.0
    mu_c, sigma_c = gauss_policy_forward(obs, packed, log_sigma_min=lo,
                                         log_sigma_max=hi)
    mu_c, sigma_c = jax.block_until_ready((mu_c, sigma_c))
    ref_mu_c, ref_sigma_c = _reference_forward(obs, params, lo, hi)
    assert jnp.allclose(mu_c, ref_mu_c, atol=1e-4, rtol=1e-4)
    assert jnp.allclose(sigma_c, ref_sigma_c, atol=1e-4, rtol=1e-4)
    assert bool(jnp.all(sigma_c >= math.exp(lo) - 1e-6))
    assert bool(jnp.all(sigma_c <= math.exp(hi) + 1e-6))

    # --- multi-step grid + batch-padding path (>= 2 tiles, B not tile-aligned) ---
    batch2 = 200
    obs2 = jax.random.normal(k_obs2, (batch2, obs_dim), dtype=jnp.float32)
    mu2, sigma2 = gauss_policy_forward(obs2, packed)
    mu2, sigma2 = jax.block_until_ready((mu2, sigma2))
    ref_mu2, ref_sigma2 = _reference_forward(obs2, params)
    assert mu2.shape == (batch2, action_dim) and sigma2.shape == (batch2, action_dim)
    assert jnp.allclose(mu2, ref_mu2, atol=1e-4, rtol=1e-4)
    assert jnp.allclose(sigma2, ref_sigma2, atol=1e-4, rtol=1e-4)

    print("KERNEL_OK")
</pallas_src>

<mosaic_0001>
module attributes {stable_mosaic.version = 11 : i64} {
  func.func @_gauss_policy_kernel(%arg0: i32, %arg1: memref<8x16xf32, #tpu.memory_space<vmem>>, %arg2: memref<16x128xf32, #tpu.memory_space<vmem>>, %arg3: memref<1x128xf32, #tpu.memory_space<vmem>>, %arg4: memref<128x128xf32, #tpu.memory_space<vmem>>, %arg5: memref<128x128xf32, #tpu.memory_space<vmem>>, %arg6: memref<8x128xf32, #tpu.memory_space<vmem>>) attributes {dimension_semantics = [#tpu.dimension_semantics<parallel>], iteration_bounds = array<i64: 1>, scalar_prefetch = 0 : i64, scratch_operands = 0 : i64, tpu.core_type = #tpu.core_type<tc>, window_params = [{transform_indices = @transform_0, window_bounds = array<i64: 8, 16>}, {pipeline_mode = #tpu.pipeline_mode<synchronous>, transform_indices = @transform_1, window_bounds = array<i64: 16, 128>}, {pipeline_mode = #tpu.pipeline_mode<synchronous>, transform_indices = @transform_2, window_bounds = array<i64: 1, 128>}, {pipeline_mode = #tpu.pipeline_mode<synchronous>, transform_indices = @transform_3, window_bounds = array<i64: 128, 128>}, {pipeline_mode = #tpu.pipeline_mode<synchronous>, transform_indices = @transform_4, window_bounds = array<i64: 128, 128>}, {transform_indices = @transform_5, window_bounds = array<i64: 8, 128>}]} {
    %c0 = arith.constant 0 : index
    %c0_0 = arith.constant 0 : index
    %0 = vector.load %arg1[%c0, %c0_0] : memref<8x16xf32, #tpu.memory_space<vmem>>, vector<8x16xf32>
    %c0_1 = arith.constant 0 : index
    %c0_2 = arith.constant 0 : index
    %1 = vector.load %arg2[%c0_1, %c0_2] : memref<16x128xf32, #tpu.memory_space<vmem>>, vector<16x128xf32>
    %cst = arith.constant dense<0.000000e+00> : vector<8x128xf32>
    %2 = tpu.matmul %0, %1, %cst {dimension_numbers = #tpu.dot_dimension_numbers<[1], [0], [0], [1], [0, 0, 1, 1], [], []>} : vector<8x16xf32>, vector<16x128xf32>, vector<8x128xf32> -> vector<8x128xf32>
    %c0_3 = arith.constant 0 : index
    %c0_4 = arith.constant 0 : index
    %3 = vector.load %arg3[%c0_3, %c0_4] : memref<1x128xf32, #tpu.memory_space<vmem>>, vector<1x128xf32>
    %4 = vector.broadcast %3 : vector<1x128xf32> to vector<8x128xf32>
    %5 = arith.addf %2, %4 : vector<8x128xf32>
    %cst_5 = arith.constant 0.000000e+00 : f32
    %6 = vector.broadcast %cst_5 : f32 to vector<8x128xf32>
    %7 = arith.maximumf %5, %6 : vector<8x128xf32>
    %c0_6 = arith.constant 0 : index
    %c0_7 = arith.constant 0 : index
    %8 = vector.load %arg4[%c0_6, %c0_7] : memref<128x128xf32, #tpu.memory_space<vmem>>, vector<128x128xf32>
    %cst_8 = arith.constant dense<0.000000e+00> : vector<8x128xf32>
    %9 = tpu.matmul %7, %8, %cst_8 {dimension_numbers = #tpu.dot_dimension_numbers<[1], [0], [0], [1], [0, 0, 1, 1], [], []>} : vector<8x128xf32>, vector<128x128xf32>, vector<8x128xf32> -> vector<8x128xf32>
    %cst_9 = arith.constant 0.000000e+00 : f32
    %10 = vector.broadcast %cst_9 : f32 to vector<8x128xf32>
    %11 = arith.maximumf %9, %10 : vector<8x128xf32>
    %c0_10 = arith.constant 0 : index
    %c0_11 = arith.constant 0 : index
    %12 = vector.load %arg5[%c0_10, %c0_11] : memref<128x128xf32, #tpu.memory_space<vmem>>, vector<128x128xf32>
    %cst_12 = arith.constant dense<0.000000e+00> : vector<8x128xf32>
    %13 = tpu.matmul %11, %12, %cst_12 {dimension_numbers = #tpu.dot_dimension_numbers<[1], [0], [0], [1], [0, 0, 1, 1], [], []>} : vector<8x128xf32>, vector<128x128xf32>, vector<8x128xf32> -> vector<8x128xf32>
    %cst_13 = arith.constant 0.000000e+00 : f32
    %14 = vector.broadcast %cst_13 : f32 to vector<8x128xf32>
    %15 = arith.maximumf %13, %14 : vector<8x128xf32>
    %16 = vector.broadcast %cst_13 : f32 to vector<8x128xf32>
    %17 = arith.subf %13, %16 : vector<8x128xf32>
    %18 = arith.cmpf one, %17, %17 : vector<8x128xf32>
    %19 = vector.broadcast %cst_13 : f32 to vector<8x128xf32>
    %20 = arith.addf %13, %19 : vector<8x128xf32>
    %21 = math.absf %17 : vector<8x128xf32>
    %cst_14 = arith.constant 0.000000e+00 : f32
    %22 = vector.broadcast %cst_14 : f32 to vector<8x128xf32>
    %23 = arith.subf %22, %21 : vector<8x128xf32>
    %24 = math.exp %23 : vector<8x128xf32>
    %25 = math.log1p %24 : vector<8x128xf32>
    %26 = arith.addf %15, %25 : vector<8x128xf32>
    %27 = arith.select %18, %20, %26 : vector<8x128xi1>, vector<8x128xf32>
    %28 = tpu.iota {dimensions = array<i32: 1>} : vector<8x128xi32>
    %c64_i32 = arith.constant 64 : i32
    %29 = vector.broadcast %c64_i32 : i32 to vector<8x128xi32>
    %30 = arith.cmpi sge, %28, %29 : vector<8x128xi32>
    %31 = arith.select %30, %27, %13 : vector<8x128xi1>, vector<8x128xf32>
    %c0_15 = arith.constant 0 : index
    %c0_16 = arith.constant 0 : index
    %32 = vector.load %arg6[%c0_15, %c0_16] : memref<8x128xf32, #tpu.memory_space<vmem>>, vector<8x128xf32>
    tpu.vector_store %arg6[%c0_15, %c0_16], %31 {strides = array<i32>} : memref<8x128xf32, #tpu.memory_space<vmem>>, vector<8x128xf32>,
    return
  }
  func.func @transform_0(%arg0: i32) -> (i32, i32) {
    %c0_i32 = arith.constant 0 : i32
    %c0_i32_0 = arith.constant 0 : i32
    return %arg0, %c0_i32 : i32, i32
  }
  func.func @transform_1(%arg0: i32) -> (i32, i32) {
    %c0_i32 = arith.constant 0 : i32
    %c0_i32_0 = arith.constant 0 : i32
    %c0_i32_1 = arith.constant 0 : i32
    return %c0_i32, %c0_i32_0 : i32, i32
  }
  func.func @transform_2(%arg0: i32) -> (i32, i32) {
    %c0_i32 = arith.constant 0 : i32
    %c0_i32_0 = arith.constant 0 : i32
    %c0_i32_1 = arith.constant 0 : i32
    return %c0_i32, %c0_i32_0 : i32, i32
  }
  func.func @transform_3(%arg0: i32) -> (i32, i32) {
    %c0_i32 = arith.constant 0 : i32
    %c0_i32_0 = arith.constant 0 : i32
    %c0_i32_1 = arith.constant 0 : i32
    return %c0_i32, %c0_i32_0 : i32, i32
  }
  func.func @transform_4(%arg0: i32) -> (i32, i32) {
    %c0_i32 = arith.constant 0 : i32
    %c0_i32_0 = arith.constant 0 : i32
    %c0_i32_1 = arith.constant 0 : i32
    return %c0_i32, %c0_i32_0 : i32, i32
  }
  func.func @transform_5(%arg0: i32) -> (i32, i32) {
    %c0_i32 = arith.constant 0 : i32
    %c0_i32_0 = arith.constant 0 : i32
    return %arg0, %c0_i32 : i32, i32
  }
}

</mosaic_0001>

<llo_original>
// kernel: tpu_custom_call.1
$region0: #{tpu_custom_call.1}
  #allocation0 [shape = 'u32[]', space=smem, size = 0x4, offset = 0x4, fixed_abs, tag = 'smem constant byte address 0x4 - core index']
  #allocation1 [shape = 'u32[144,128]{1,0:T(1,128)}', space=vmem, size = 0x12000, scoped, tag = 'internal scratch']
  %s0 = inlined_call_operand.hbm [shape: f32[8,16], index: 0, kind: input, shape index: {}]
  %s1 = inlined_call_operand.hbm [shape: f32[16,128], index: 1, kind: input, shape index: {}]
  %s2 = inlined_call_operand.vmem [shape: f32[1,128], index: 2, kind: input, shape index: {}]
  %s3 = inlined_call_operand.hbm [shape: f32[128,128], index: 3, kind: input, shape index: {}]
  %s4 = inlined_call_operand.hbm [shape: f32[128,128], index: 4, kind: input, shape index: {}]
  %s5 = inlined_call_operand.hbm [shape: f32[8,128], index: 5, kind: output, shape index: {}]
  %s6 = sld [smem:[#allocation0]]
  $region46: #{tpu_custom_call.1} parent=0
    _
  %s8 = ssub.s32 1, %s6
  %s9 = scalar_select 0, %s8, %s6
  $region1: #{tpu_custom_call.1} parent=0
    #allocation2 [shape = 'u8[4096]{0}', space=vmem, size = 0x1000, scoped, tag = 'input window, operand 0, single buffered']
    #allocation3 [shape = 's32[1]{0}', space=sflag, size = 0x4, scoped, tag = 'scoped memory for tpu_custom_call.1']
    #allocation4 [shape = 's32[1]{0}', space=sflag, size = 0x4, scoped, tag = 'scoped memory for tpu_custom_call.1']
    #allocation5 [shape = 'u8[8192]{0}', space=vmem, size = 0x2000, scoped, tag = 'input window, operand 1, single buffered']
    #allocation6 [shape = 's32[1]{0}', space=sflag, size = 0x4, scoped, tag = 'scoped memory for tpu_custom_call.1']
    #allocation7 [shape = 'u8[65536]{0}', space=vmem, size = 0x10000, scoped, tag = 'input window, operand 3, single buffered']
    #allocation8 [shape = 'u8[65536]{0}', space=vmem, size = 0x10000, scoped, tag = 'input window, operand 4, single buffered']
    #allocation9 [shape = 's32[1]{0}', space=sflag, size = 0x4, scoped, tag = 'scoped memory for tpu_custom_call.1']
    #allocation10 [shape = 'u8[4096]{0}', space=vmem, size = 0x1000, scoped, tag = 'output window, operand 0, single buffered']
    %10 = vsyncpa [#allocation3], 0
    %11 = vsyncpa [#allocation6], 0
    %12 = vsyncpa [#allocation9], 0
    %13 = vsyncpa [#allocation4], 0
    // Predicated region
    $region2: #{tpu_custom_call.1} parent=1 // pred_check
      _
    $region3: #{tpu_custom_call.1} parent=1 // pred_check_branch
      %15 = sbr.rel (0) target = $region5
    $region4: #{tpu_custom_call.1} parent=1 // pred_region
      %s17 = ssub.s32 128, 128
      %18 = vsyncadd [#allocation3], %s17
      %s20 = sshll.u32 [#allocation2], 4
      %s21 = int_to_ptr.vmem [resolvable:$true] %s20
      %23 = dma.hbm_to_vmem [thread:$0]  %s0, 128, %s21, [#allocation3]
    $region5: #{tpu_custom_call.1} parent=1 // pred_fallthru
      _
    // Predicated region
    $region6: #{tpu_custom_call.1} parent=1 // pred_check
      _
    $region7: #{tpu_custom_call.1} parent=1 // pred_check_branch
      %25 = sbr.rel (0) target = $region9
    $region8: #{tpu_custom_call.1} parent=1 // pred_region
      %s27 = ssub.s32 256, 256
      %28 = vsyncadd [#allocation6], %s27
      %s29 = sshll.u32 [#allocation5], 4
      %s30 = int_to_ptr.vmem [resolvable:$true] %s29
      %35 = dma.hbm_to_vmem [thread:$0]  %s1, 256, %s30, [#allocation6], 128, 128, 8
    $region9: #{tpu_custom_call.1} parent=1 // pred_fallthru
      _
    // Predicated region
    $region10: #{tpu_custom_call.1} parent=1 // pred_check
      _
    $region11: #{tpu_custom_call.1} parent=1 // pred_check_branch
      %37 = sbr.rel (0) target = $region13
    $region12: #{tpu_custom_call.1} parent=1 // pred_region
      _
    $region13: #{tpu_custom_call.1} parent=1 // pred_fallthru
      _
    // Predicated region
    $region14: #{tpu_custom_call.1} parent=1 // pred_check
      _
    $region15: #{tpu_custom_call.1} parent=1 // pred_check_branch
      %39 = sbr.rel (0) target = $region17
    $region16: #{tpu_custom_call.1} parent=1 // pred_region
      %s41 = ssub.s32 2048, 2048
      %42 = vsyncadd [#allocation6], %s41
      %s43 = sshll.u32 [#allocation7], 4
      %s44 = int_to_ptr.vmem [resolvable:$true] %s43
      %49 = dma.hbm_to_vmem [thread:$0]  %s3, 2048, %s44, [#allocation6], 128, 128, 8
    $region17: #{tpu_custom_call.1} parent=1 // pred_fallthru
      _
    // Predicated region
    $region18: #{tpu_custom_call.1} parent=1 // pred_check
      _
    $region19: #{tpu_custom_call.1} parent=1 // pred_check_branch
      %51 = sbr.rel (0) target = $region21
    $region20: #{tpu_custom_call.1} parent=1 // pred_region
      %s53 = ssub.s32 2048, 2048
      %54 = vsyncadd [#allocation9], %s53
      %s55 = sshll.u32 [#allocation8], 4
      %s56 = int_to_ptr.vmem [resolvable:$true] %s55
      %61 = dma.hbm_to_vmem [thread:$0]  %s4, 2048, %s56, [#allocation9], 128, 128, 8
    $region21: #{tpu_custom_call.1} parent=1 // pred_fallthru
      _
    // Predicated region
    $region22: #{tpu_custom_call.1} parent=1 // pred_check
      _
    $region23: #{tpu_custom_call.1} parent=1 // pred_check_branch
      %63 = sbr.rel (0) target = $region25
    $region24: #{tpu_custom_call.1} parent=1 // pred_region
      %64 = dma.done [#allocation3], 128
    $region25: #{tpu_custom_call.1} parent=1 // pred_fallthru
      _
    // Predicated region
    $region26: #{tpu_custom_call.1} parent=1 // pred_check
      _
    $region27: #{tpu_custom_call.1} parent=1 // pred_check_branch
      %66 = sbr.rel (0) target = $region29
    $region28: #{tpu_custom_call.1} parent=1 // pred_region
      %67 = dma.done [#allocation6], 256
    $region29: #{tpu_custom_call.1} parent=1 // pred_fallthru
      _
    // Predicated region
    $region30: #{tpu_custom_call.1} parent=1 // pred_check
      _
    $region31: #{tpu_custom_call.1} parent=1 // pred_check_branch
      %69 = sbr.rel (0) target = $region33
    $region32: #{tpu_custom_call.1} parent=1 // pred_region
      %70 = dma.done [#allocation6], 2048
    $region33: #{tpu_custom_call.1} parent=1 // pred_fallthru
      _
    // Predicated region
    $region34: #{tpu_custom_call.1} parent=1 // pred_check
      _
    $region35: #{tpu_custom_call.1} parent=1 // pred_check_branch
      %72 = sbr.rel (0) target = $region37
    $region36: #{tpu_custom_call.1} parent=1 // pred_region
      %73 = dma.done [#allocation9], 2048
    $region37: #{tpu_custom_call.1} parent=1 // pred_fallthru
      _
    %v74 = vld [vmem:[#allocation2] sm:$0xff]
    %v75 = vld [vmem:[#allocation5] sm:$0xff]
    %v76 = vld [vmem:[#allocation5 + $0x8] sm:$0xff]
    %v77 = vld [vmem:[%s2] sm:$0x1]
    %v79 = vlaneseq
    %v80 = vshrl.u32 %v79, 7
    %v81 = vsub.s32 0, %v80
    %v82 = vrot.slane %v77, %v81
    %vm84 = vcmask 130048
    %v86 = vsel %vm84, %v74, 0
    %88 = vmatprep.subr.mxu0 0.0
    %89 = vmatpush1.msra.mxu0 %v75
    %90 = vmatprep.subr.mxu0 0.0
    %91 = vmatpush1.msra.mxu0 %v76
    %92 = vmatprep.subr.mxu0 0.0
    %93 = vmatpush1.msra.mxu0 0.0
    %94 = vmatprep.subr.mxu0 0.0
    %95 = vmatpush1.msra.mxu0 0.0
    %96 = vmatprep.subr.mxu0 0.0
    %97 = vmatpush1.msra.mxu0 0.0
    %98 = vmatprep.subr.mxu0 0.0
    %99 = vmatpush1.msra.mxu0 0.0
    %100 = vmatprep.subr.mxu0 0.0
    %101 = vmatpush1.msra.mxu0 0.0
    %102 = vmatprep.subr.mxu0 0.0
    %103 = vmatpush1.msra.mxu0 0.0
    %104 = vmatprep.subr.mxu0 0.0
    %105 = vmatpush1.msra.mxu0 0.0
    %106 = vmatprep.subr.mxu0 0.0
    %107 = vmatpush1.msra.mxu0 0.0
    %108 = vmatprep.subr.mxu0 0.0
    %109 = vmatpush1.msra.mxu0 0.0
    %110 = vmatprep.subr.mxu0 0.0
    %111 = vmatpush1.msra.mxu0 0.0
    %112 = vmatprep.subr.mxu0 0.0
    %113 = vmatpush1.msra.mxu0 0.0
    %114 = vmatprep.subr.mxu0 0.0
    %115 = vmatpush1.msra.mxu0 0.0
    %116 = vmatprep.subr.mxu0 0.0
    %117 = vmatpush1.msra.mxu0 0.0
    %118 = vmatprep.subr.mxu0 0.0
    %119 = vmatpush1.msra.mxu0 0.0
    %120 = vmatprep.subr.mxu0 0.0
    %121 = vmatpush1.msra.mxu0 0.0
    %122 = vmatprep.subr.mxu0 0.0
    %123 = vmatpush1.msra.mxu0 0.0
    %124 = vmatprep.subr.mxu0 0.0
    %125 = vmatpush1.msra.mxu0 0.0
    %126 = vmatprep.subr.mxu0 0.0
    %127 = vmatpush1.msra.mxu0 0.0
    %128 = vmatprep.subr.mxu0 0.0
    %129 = vmatpush1.msra.mxu0 0.0
    %130 = vmatprep.subr.mxu0 0.0
    %131 = vmatpush1.msra.mxu0 0.0
    %132 = vmatprep.subr.mxu0 0.0
    %133 = vmatpush1.msra.mxu0 0.0
    %134 = vmatprep.subr.mxu0 0.0
    %135 = vmatpush1.msra.mxu0 0.0
    %136 = vmatprep.subr.mxu0 0.0
    %137 = vmatpush1.msra.mxu0 0.0
    %138 = vmatprep.subr.mxu0 0.0
    %139 = vmatpush1.msra.mxu0 0.0
    %140 = vmatprep.subr.mxu0 0.0
    %141 = vmatpush1.msra.mxu0 0.0
    %142 = vmatprep.subr.mxu0 0.0
    %143 = vmatpush1.msra.mxu0 0.0
    %144 = vmatprep.subr.mxu0 0.0
    %145 = vmatpush1.msra.mxu0 0.0
    %146 = vmatprep.subr.mxu0 0.0
    %147 = vmatpush1.msra.mxu0 0.0
    %148 = vmatprep.subr.mxu0 0.0
    %149 = vmatpush1.msra.mxu0 0.0
    %150 = vmatprep.subr.mxu0 0.0
    %151 = vmatpush1.msra.mxu0 0.0
    %152 = vmatprep.mubr.f32.mxu0 0.0
    %153 = vmatmul.mubr.f32.gmra.mrb[0].mxu0 %v86
    %v154 = vpop.f32.mrb[0].mxu0
    %v155 = vadd.f32 %v82, %v154
    %v156 = vpop.f32.mrb[0].mxu0
    %157 = vdwg.mxu0
    %v158 = vmax.f32 %v155, 0.0
    %v159 = vld [vmem:[#allocation7] sm:$0xff]
    %v160 = vld [vmem:[#allocation7 + $0x8] sm:$0xff]
    %v161 = vld [vmem:[#allocation7 + $0x10] sm:$0xff]
    %v162 = vld [vmem:[#allocation7 + $0x18] sm:$0xff]
    %v163 = vld [vmem:[#allocation7 + $0x20] sm:$0xff]
    %v164 = vld [vmem:[#allocation7 + $0x28] sm:$0xff]
    %v165 = vld [vmem:[#allocation7 + $0x30] sm:$0xff]
    %v166 = vld [vmem:[#allocation7 + $0x38] sm:$0xff]
    %v167 = vld [vmem:[#allocation7 + $0x40] sm:$0xff]
    %v168 = vld [vmem:[#allocation7 + $0x48] sm:$0xff]
    %v169 = vld [vmem:[#allocation7 + $0x50] sm:$0xff]
    %v170 = vld [vmem:[#allocation7 + $0x58] sm:$0xff]
    %v171 = vld [vmem:[#allocation7 + $0x60] sm:$0xff]
    %v172 = vld [vmem:[#allocation7 + $0x68] sm:$0xff]
    %v173 = vld [vmem:[#allocation7 + $0x70] sm:$0xff]
    %v174 = vld [vmem:[#allocation7 + $0x78] sm:$0xff]
    %175 = vmatprep.subr.mxu0 0.0
    %176 = vmatpush1.msra.mxu0 %v159
    %177 = vmatprep.subr.mxu0 0.0
    %178 = vmatpush1.msra.mxu0 %v160
    %179 = vmatprep.subr.mxu0 0.0
    %180 = vmatpush1.msra.mxu0 %v161
    %181 = vmatprep.subr.mxu0 0.0
    %182 = vmatpush1.msra.mxu0 %v162
    %183 = vmatprep.subr.mxu0 0.0
    %184 = vmatpush1.msra.mxu0 %v163
    %185 = vmatprep.subr.mxu0 0.0
    %186 = vmatpush1.msra.mxu0 %v164
    %187 = vmatprep.subr.mxu0 0.0
    %188 = vmatpush1.msra.mxu0 %v165
    %189 = vmatprep.subr.mxu0 0.0
    %190 = vmatpush1.msra.mxu0 %v166
    %191 = vmatprep.subr.mxu0 0.0
    %192 = vmatpush1.msra.mxu0 %v167
    %193 = vmatprep.subr.mxu0 0.0
    %194 = vmatpush1.msra.mxu0 %v168
    %195 = vmatprep.subr.mxu0 0.0
    %196 = vmatpush1.msra.mxu0 %v169
    %197 = vmatprep.subr.mxu0 0.0
    %198 = vmatpush1.msra.mxu0 %v170
    %199 = vmatprep.subr.mxu0 0.0
    %200 = vmatpush1.msra.mxu0 %v171
    %201 = vmatprep.subr.mxu0 0.0
    %202 = vmatpush1.msra.mxu0 %v172
    %203 = vmatprep.subr.mxu0 0.0
    %204 = vmatpush1.msra.mxu0 %v173
    %205 = vmatprep.subr.mxu0 0.0
    %206 = vmatpush1.msra.mxu0 %v174
    %207 = vmatprep.subr.mxu0 0.0
    %208 = vmatpush1.msra.mxu0 0.0
    %209 = vmatprep.subr.mxu0 0.0
    %210 = vmatpush1.msra.mxu0 0.0
    %211 = vmatprep.subr.mxu0 0.0
    %212 = vmatpush1.msra.mxu0 0.0
    %213 = vmatprep.subr.mxu0 0.0
    %214 = vmatpush1.msra.mxu0 0.0
    %215 = vmatprep.subr.mxu0 0.0
    %216 = vmatpush1.msra.mxu0 0.0
    %217 = vmatprep.subr.mxu0 0.0
    %218 = vmatpush1.msra.mxu0 0.0
    %219 = vmatprep.subr.mxu0 0.0
    %220 = vmatpush1.msra.mxu0 0.0
    %221 = vmatprep.subr.mxu0 0.0
    %222 = vmatpush1.msra.mxu0 0.0
    %223 = vmatprep.subr.mxu0 0.0
    %224 = vmatpush1.msra.mxu0 0.0
    %225 = vmatprep.subr.mxu0 0.0
    %226 = vmatpush1.msra.mxu0 0.0
    %227 = vmatprep.subr.mxu0 0.0
    %228 = vmatpush1.msra.mxu0 0.0
    %229 = vmatprep.subr.mxu0 0.0
    %230 = vmatpush1.msra.mxu0 0.0
    %231 = vmatprep.subr.mxu0 0.0
    %232 = vmatpush1.msra.mxu0 0.0
    %233 = vmatprep.subr.mxu0 0.0
    %234 = vmatpush1.msra.mxu0 0.0
    %235 = vmatprep.subr.mxu0 0.0
    %236 = vmatpush1.msra.mxu0 0.0
    %237 = vmatprep.subr.mxu0 0.0
    %238 = vmatpush1.msra.mxu0 0.0
    %239 = vmatprep.mubr.f32.mxu0 0.0
    %240 = vmatmul.mubr.f32.gmra.mrb[0].mxu0 %v158
    %v241 = vpop.f32.mrb[0].mxu0
    %v242 = vadd.f32 0.0, %v241
    %v243 = vpop.f32.mrb[0].mxu0
    %244 = vdwg.mxu0
    %v245 = vmax.f32 %v242, 0.0
    %v246 = vld [vmem:[#allocation8] sm:$0xff]
    %v247 = vld [vmem:[#allocation8 + $0x8] sm:$0xff]
    %v248 = vld [vmem:[#allocation8 + $0x10] sm:$0xff]
    %v249 = vld [vmem:[#allocation8 + $0x18] sm:$0xff]
    %v250 = vld [vmem:[#allocation8 + $0x20] sm:$0xff]
    %v251 = vld [vmem:[#allocation8 + $0x28] sm:$0xff]
    %v252 = vld [vmem:[#allocation8 + $0x30] sm:$0xff]
    %v253 = vld [vmem:[#allocation8 + $0x38] sm:$0xff]
    %v254 = vld [vmem:[#allocation8 + $0x40] sm:$0xff]
    %v255 = vld [vmem:[#allocation8 + $0x48] sm:$0xff]
    %v256 = vld [vmem:[#allocation8 + $0x50] sm:$0xff]
    %v257 = vld [vmem:[#allocation8 + $0x58] sm:$0xff]
    %v258 = vld [vmem:[#allocation8 + $0x60] sm:$0xff]
    %v259 = vld [vmem:[#allocation8 + $0x68] sm:$0xff]
    %v260 = vld [vmem:[#allocation8 + $0x70] sm:$0xff]
    %v261 = vld [vmem:[#allocation8 + $0x78] sm:$0xff]
    %262 = vmatprep.subr.mxu0 0.0
    %263 = vmatpush1.msra.mxu0 %v246
    %264 = vmatprep.subr.mxu0 0.0
    %265 = vmatpush1.msra.mxu0 %v247
    %266 = vmatprep.subr.mxu0 0.0
    %267 = vmatpush1.msra.mxu0 %v248
    %268 = vmatprep.subr.mxu0 0.0
    %269 = vmatpush1.msra.mxu0 %v249
    %270 = vmatprep.subr.mxu0 0.0
    %271 = vmatpush1.msra.mxu0 %v250
    %272 = vmatprep.subr.mxu0 0.0
    %273 = vmatpush1.msra.mxu0 %v251
    %274 = vmatprep.subr.mxu0 0.0
    %275 = vmatpush1.msra.mxu0 %v252
    %276 = vmatprep.subr.mxu0 0.0
    %277 = vmatpush1.msra.mxu0 %v253
    %278 = vmatprep.subr.mxu0 0.0
    %279 = vmatpush1.msra.mxu0 %v254
    %280 = vmatprep.subr.mxu0 0.0
    %281 = vmatpush1.msra.mxu0 %v255
    %282 = vmatprep.subr.mxu0 0.0
    %283 = vmatpush1.msra.mxu0 %v256
    %284 = vmatprep.subr.mxu0 0.0
    %285 = vmatpush1.msra.mxu0 %v257
    %286 = vmatprep.subr.mxu0 0.0
    %287 = vmatpush1.msra.mxu0 %v258
    %288 = vmatprep.subr.mxu0 0.0
    %289 = vmatpush1.msra.mxu0 %v259
    %290 = vmatprep.subr.mxu0 0.0
    %291 = vmatpush1.msra.mxu0 %v260
    %292 = vmatprep.subr.mxu0 0.0
    %293 = vmatpush1.msra.mxu0 %v261
    %294 = vmatprep.subr.mxu0 0.0
    %295 = vmatpush1.msra.mxu0 0.0
    %296 = vmatprep.subr.mxu0 0.0
    %297 = vmatpush1.msra.mxu0 0.0
    %298 = vmatprep.subr.mxu0 0.0
    %299 = vmatpush1.msra.mxu0 0.0
    %300 = vmatprep.subr.mxu0 0.0
    %301 = vmatpush1.msra.mxu0 0.0
    %302 = vmatprep.subr.mxu0 0.0
    %303 = vmatpush1.msra.mxu0 0.0
    %304 = vmatprep.subr.mxu0 0.0
    %305 = vmatpush1.msra.mxu0 0.0
    %306 = vmatprep.subr.mxu0 0.0
    %307 = vmatpush1.msra.mxu0 0.0
    %308 = vmatprep.subr.mxu0 0.0
    %309 = vmatpush1.msra.mxu0 0.0
    %310 = vmatprep.subr.mxu0 0.0
    %311 = vmatpush1.msra.mxu0 0.0
    %312 = vmatprep.subr.mxu0 0.0
    %313 = vmatpush1.msra.mxu0 0.0
    %314 = vmatprep.subr.mxu0 0.0
    %315 = vmatpush1.msra.mxu0 0.0
    %316 = vmatprep.subr.mxu0 0.0
    %317 = vmatpush1.msra.mxu0 0.0
    %318 = vmatprep.subr.mxu0 0.0
    %319 = vmatpush1.msra.mxu0 0.0
    %320 = vmatprep.subr.mxu0 0.0
    %321 = vmatpush1.msra.mxu0 0.0
    %322 = vmatprep.subr.mxu0 0.0
    %323 = vmatpush1.msra.mxu0 0.0
    %324 = vmatprep.subr.mxu0 0.0
    %325 = vmatpush1.msra.mxu0 0.0
    %326 = vmatprep.mubr.f32.mxu0 0.0
    %327 = vmatmul.mubr.f32.gmra.mrb[0].mxu0 %v245
    %v328 = vpop.f32.mrb[0].mxu0
    %v329 = vadd.f32 0.0, %v328
    %v330 = vpop.f32.mrb[0].mxu0
    %331 = vdwg.mxu0
    %v332 = vmax.f32 %v329, 0.0
    %vm333 = vcmp.ne.f32.partialorder %v329, %v329
    %v334 = vadd.f32 %v329, 0.0
    %v335 = vand.u32 2147483647, %v329
    %v336 = vsub.f32 0.0, %v335
    %v337 = vmul.f32 %v336, 1.442695
    %v338 = vpow.pop %v337
    %v339 = vadd.f32 %v338, 1.0
    %v340 = vlog2.pop %v339
    %v341 = vmul.f32 %v340, 0.6931472
    %v342 = vmul.f32 -0.5, %v338
    %v343 = vadd.f32 %v342, 1.0
    %v344 = vmul.f32 %v343, %v338
    %v345 = vand.u32 2147483647, %v338
    %vm346 = vcmp.lt.f32.partialorder %v345, 0.0004427343
    %v347 = vsel %vm346, %v344, %v341
    %v348 = vadd.f32 %v332, %v347
    %v349 = vsel %vm333, %v334, %v348
    %v350 = vlaneseq
    %v351 = vand.u32 %v350, 127
    %vm352 = vcmp.ge.s32.totalorder %v351, 64
    %v353 = vsel %vm352, %v349, %v329
    %354 = vst [vmem:[#allocation10] sm:$0xff] %v353
    // Predicated region
    $region38: #{tpu_custom_call.1} parent=1 // pred_check
      _
    $region39: #{tpu_custom_call.1} parent=1 // pred_check_branch
      %356 = sbr.rel (0) target = $region41
    $region40: #{tpu_custom_call.1} parent=1 // pred_region
      %s358 = ssub.s32 128, 128
      %359 = vsyncadd [#allocation4], %s358
      %s361 = sshll.u32 [#allocation10], 4
      %s362 = int_to_ptr.vmem [resolvable:$true] %s361
      %364 = dma.vmem_to_hbm [thread:$0]  %s362, 128, %s5, [#allocation4]
    $region41: #{tpu_custom_call.1} parent=1 // pred_fallthru
      _
    // Predicated region
    $region42: #{tpu_custom_call.1} parent=1 // pred_check
      _
    $region43: #{tpu_custom_call.1} parent=1 // pred_check_branch
      %366 = sbr.rel (0) target = $region45
    $region44: #{tpu_custom_call.1} parent=1 // pred_region
      %367 = dma.done [#allocation4], 128
    $region45: #{tpu_custom_call.1} parent=1 // pred_fallthru
      _
    %368 = vsyncpa [#allocation3], 1
    %369 = vsyncpa [#allocation6], 1
    %370 = vsyncpa [#allocation9], 1
    %371 = vsyncpa [#allocation4], 1

</llo_original>
